<compile_context>
chip_gen: v6e
topology: v6e:2x2x1
jax: 0.10.0
libtpu: 0.0.40
codegen_flags: <defaults>
</compile_context>

<pallas_src>
import jax
import jax.numpy as jnp
from jax.experimental import pallas as pl
from jax.experimental.pallas import tpu as pltpu

FEAT = 576   # mobilenet-v3-small feature width
HID = 100
NCLS = 22


def _round_up(x, m):
    return (x + m - 1) // m * m


def head_kernel(f_ref, w1_ref, b1_ref, w3_ref, b3_ref, o_ref):
    # f_ref: (TB, 576) bf16 pooled features; w1/w3 bf16; b1/b3 f32 (1, N).
    h = jnp.dot(f_ref[...], w1_ref[...],
                preferred_element_type=jnp.float32)              # (TB, 100) f32
    h = jnp.maximum(h + b1_ref[...], 0.0)                        # relu(fc1)
    logits = jnp.dot(h.astype(w3_ref.dtype), w3_ref[...],
                     preferred_element_type=jnp.float32)          # (TB, 22) f32
    logits = logits + b3_ref[...]
    # Numerically stable softmax over the class axis; exact normalization.
    m = jnp.max(logits, axis=-1, keepdims=True)
    e = jnp.exp(logits - m)
    denom = jnp.sum(e, axis=-1, keepdims=True)
    o_ref[...] = (e / denom).astype(o_ref.dtype)


def _choose_batch_tile(B, max_tb=512):
    b8 = _round_up(max(B, 1), 8)
    tb = min(max_tb, b8)
    # v7x has 2 TensorCores: keep >= 2 grid steps whenever the batch allows so
    # the "parallel" batch axis can be sharded across both cores.
    if b8 >= 16:
        tb = min(tb, max(8, (b8 // 2) // 8 * 8))
    return tb


def _vmem_limit_bytes(tb):
    # 2x double-buffered input/output tiles + resident weights + headroom for
    # in-kernel intermediates (lane widths rounded up to 128).
    feat_bufs = 2 * tb * FEAT * 2                 # bf16 feature tiles
    out_bufs = 2 * tb * 128 * 4                   # f32 output tiles (padded)
    weights = FEAT * 128 * 2 + 128 * 128 * 2 + 2 * 8 * 128 * 4
    interm = 6 * tb * 128 * 4                     # h / logits / e scratch
    total = feat_bufs + out_bufs + weights + interm + (4 << 20)
    # Safe on every generation (v5e scoped default is only 16 MiB; v7x has
    # 64 MiB physical VMEM).
    return max(16 << 20, min(48 << 20, _round_up(total, 1 << 20)))


def model_forward(x_nchw, w1, b1, w3, b3, *, max_tb=512):
    B, C, H, W = x_nchw.shape
    assert C == FEAT
    S = H * W

    # Backbone stand-in: global average pool over the (minor) spatial axis in
    # the native NCHW layout.  One fused XLA reduction => exactly one HBM read
    # of x, no transpose, no padding of x.  Sum in f32 for accuracy, then cast
    # the tiny feature tensor to bf16 for the MXU.
    feat = jnp.mean(x_nchw.reshape(B, C, S).astype(jnp.float32), axis=-1)
    feat = feat.astype(jnp.bfloat16)                               # (B, 576)

    w1b = w1.astype(jnp.bfloat16)
    w3b = w3.astype(jnp.bfloat16)
    b1f = b1.reshape(1, HID).astype(jnp.float32)
    b3f = b3.reshape(1, NCLS).astype(jnp.float32)

    tb = _choose_batch_tile(B, max_tb)
    b_pad = _round_up(B, tb)
    if b_pad != B:
        # Pads only the tiny (B, 576) feature tensor, never the big x tensor.
        feat = jnp.pad(feat, ((0, b_pad - B), (0, 0)))

    out = pl.pallas_call(
        head_kernel,
        out_shape=jax.ShapeDtypeStruct((b_pad, NCLS), jnp.float32),
        grid=(b_pad // tb,),
        in_specs=[
            pl.BlockSpec((tb, FEAT), lambda i: (i, 0)),
            pl.BlockSpec((FEAT, HID), lambda i: (0, 0)),   # weights resident
            pl.BlockSpec((1, HID), lambda i: (0, 0)),
            pl.BlockSpec((HID, NCLS), lambda i: (0, 0)),
            pl.BlockSpec((1, NCLS), lambda i: (0, 0)),
        ],
        out_specs=pl.BlockSpec((tb, NCLS), lambda i: (i, 0)),
        compiler_params=pltpu.CompilerParams(
            dimension_semantics=("parallel",),
            vmem_limit_bytes=_vmem_limit_bytes(tb)),
    )(feat, w1b, b1f, w3b, b3f)

    return out[:B]


if __name__ == "__main__":
    key = jax.random.PRNGKey(0)
    k_x, k_w1, k_b1, k_w3, k_b3 = jax.random.split(key, 5)

    # Small deterministic inputs: batch=2, channels=576 (required by fc1),
    # spatial 4x4.
    B, H, W = 2, 4, 4
    x = jax.random.normal(k_x, (B, FEAT, H, W), dtype=jnp.float32)

    # Deterministic parameter init (PyTorch Linear-like uniform scale).
    lim1 = 1.0 / (FEAT ** 0.5)
    lim3 = 1.0 / (HID ** 0.5)
    w1 = jax.random.uniform(k_w1, (FEAT, HID), minval=-lim1, maxval=lim1,
                            dtype=jnp.float32)
    b1 = jax.random.uniform(k_b1, (HID,), minval=-lim1, maxval=lim1,
                            dtype=jnp.float32)
    w3 = jax.random.uniform(k_w3, (HID, NCLS), minval=-lim3, maxval=lim3,
                            dtype=jnp.float32)
    b3 = jax.random.uniform(k_b3, (NCLS,), minval=-lim3, maxval=lim3,
                            dtype=jnp.float32)

    out = model_forward(x, w1, b1, w3, b3)
    out = jax.block_until_ready(out)

    # Pure-JAX f32 reference of the same forward pass.
    feat_ref = jnp.mean(x.reshape(B, FEAT, H * W), axis=-1)
    h_ref = jnp.maximum(feat_ref @ w1 + b1, 0.0)
    ref = jax.nn.softmax(h_ref @ w3 + b3, axis=1)

    assert out.shape == (B, NCLS)
    row_sums = jnp.sum(out, axis=1)
    assert bool(jnp.all(jnp.abs(row_sums - 1.0) < 1e-3))
    assert bool(jnp.max(jnp.abs(out - ref)) < 1e-2)
    print("KERNEL_OK")
</pallas_src>

<mosaic_0001>
module attributes {stable_mosaic.version = 11 : i64} {
  func.func @head_kernel(%arg0: i32, %arg1: memref<8x576xbf16, #tpu.memory_space<vmem>>, %arg2: memref<576x100xbf16, #tpu.memory_space<vmem>>, %arg3: memref<1x100xf32, #tpu.memory_space<vmem>>, %arg4: memref<100x22xbf16, #tpu.memory_space<vmem>>, %arg5: memref<1x22xf32, #tpu.memory_space<vmem>>, %arg6: memref<8x22xf32, #tpu.memory_space<vmem>>) attributes {dimension_semantics = [#tpu.dimension_semantics<parallel>], iteration_bounds = array<i64: 1>, scalar_prefetch = 0 : i64, scratch_operands = 0 : i64, tpu.core_type = #tpu.core_type<tc>, window_params = [{transform_indices = @transform_0, window_bounds = array<i64: 8, 576>}, {pipeline_mode = #tpu.pipeline_mode<synchronous>, transform_indices = @transform_1, window_bounds = array<i64: 576, 100>}, {pipeline_mode = #tpu.pipeline_mode<synchronous>, transform_indices = @transform_2, window_bounds = array<i64: 1, 100>}, {pipeline_mode = #tpu.pipeline_mode<synchronous>, transform_indices = @transform_3, window_bounds = array<i64: 100, 22>}, {pipeline_mode = #tpu.pipeline_mode<synchronous>, transform_indices = @transform_4, window_bounds = array<i64: 1, 22>}, {transform_indices = @transform_5, window_bounds = array<i64: 8, 22>}]} {
    %c0 = arith.constant 0 : index
    %c0_0 = arith.constant 0 : index
    %0 = vector.load %arg1[%c0, %c0_0] : memref<8x576xbf16, #tpu.memory_space<vmem>>, vector<8x576xbf16>
    %c0_1 = arith.constant 0 : index
    %c0_2 = arith.constant 0 : index
    %1 = vector.load %arg2[%c0_1, %c0_2] : memref<576x100xbf16, #tpu.memory_space<vmem>>, vector<576x100xbf16>
    %cst = arith.constant dense<0.000000e+00> : vector<8x100xf32>
    %2 = tpu.matmul %0, %1, %cst {dimension_numbers = #tpu.dot_dimension_numbers<[1], [0], [0], [1], [0, 0, 1, 1], [], []>} : vector<8x576xbf16>, vector<576x100xbf16>, vector<8x100xf32> -> vector<8x100xf32>
    %c0_3 = arith.constant 0 : index
    %c0_4 = arith.constant 0 : index
    %3 = vector.load %arg3[%c0_3, %c0_4] : memref<1x100xf32, #tpu.memory_space<vmem>>, vector<1x100xf32>
    %4 = vector.broadcast %3 : vector<1x100xf32> to vector<8x100xf32>
    %5 = arith.addf %2, %4 : vector<8x100xf32>
    %cst_5 = arith.constant 0.000000e+00 : f32
    %6 = vector.broadcast %cst_5 : f32 to vector<8x100xf32>
    %7 = arith.maximumf %5, %6 : vector<8x100xf32>
    %8 = arith.truncf %7 : vector<8x100xf32> to vector<8x100xbf16>
    %c0_6 = arith.constant 0 : index
    %c0_7 = arith.constant 0 : index
    %9 = vector.load %arg4[%c0_6, %c0_7] : memref<100x22xbf16, #tpu.memory_space<vmem>>, vector<100x22xbf16>
    %cst_8 = arith.constant dense<0.000000e+00> : vector<8x22xf32>
    %10 = tpu.matmul %8, %9, %cst_8 {dimension_numbers = #tpu.dot_dimension_numbers<[1], [0], [0], [1], [0, 0, 1, 1], [], []>} : vector<8x100xbf16>, vector<100x22xbf16>, vector<8x22xf32> -> vector<8x22xf32>
    %c0_9 = arith.constant 0 : index
    %c0_10 = arith.constant 0 : index
    %11 = vector.load %arg5[%c0_9, %c0_10] : memref<1x22xf32, #tpu.memory_space<vmem>>, vector<1x22xf32>
    %12 = vector.broadcast %11 : vector<1x22xf32> to vector<8x22xf32>
    %13 = arith.addf %10, %12 : vector<8x22xf32>
    %cst_11 = arith.constant dense<0xFF800000> : vector<8xf32>
    %14 = vector.multi_reduction <maximumf>, %13, %cst_11 [1] : vector<8x22xf32> to vector<8xf32>
    %15 = vector.shape_cast %14 : vector<8xf32> to vector<8x1xf32>
    %16 = vector.broadcast %15 : vector<8x1xf32> to vector<8x22xf32>
    %17 = arith.subf %13, %16 : vector<8x22xf32>
    %18 = math.exp %17 : vector<8x22xf32>
    %cst_12 = arith.constant dense<0.000000e+00> : vector<8xf32>
    %19 = vector.multi_reduction <add>, %18, %cst_12 [1] : vector<8x22xf32> to vector<8xf32>
    %20 = vector.shape_cast %19 : vector<8xf32> to vector<8x1xf32>
    %21 = vector.broadcast %20 : vector<8x1xf32> to vector<8x22xf32>
    %22 = arith.divf %18, %21 : vector<8x22xf32>
    %c0_13 = arith.constant 0 : index
    %c0_14 = arith.constant 0 : index
    %23 = vector.load %arg6[%c0_13, %c0_14] : memref<8x22xf32, #tpu.memory_space<vmem>>, vector<8x22xf32>
    tpu.vector_store %arg6[%c0_13, %c0_14], %22 {strides = array<i32>} : memref<8x22xf32, #tpu.memory_space<vmem>>, vector<8x22xf32>,
    return
  }
  func.func @transform_0(%arg0: i32) -> (i32, i32) {
    %c0_i32 = arith.constant 0 : i32
    %c0_i32_0 = arith.constant 0 : i32
    return %arg0, %c0_i32 : i32, i32
  }
  func.func @transform_1(%arg0: i32) -> (i32, i32) {
    %c0_i32 = arith.constant 0 : i32
    %c0_i32_0 = arith.constant 0 : i32
    %c0_i32_1 = arith.constant 0 : i32
    return %c0_i32, %c0_i32_0 : i32, i32
  }
  func.func @transform_2(%arg0: i32) -> (i32, i32) {
    %c0_i32 = arith.constant 0 : i32
    %c0_i32_0 = arith.constant 0 : i32
    %c0_i32_1 = arith.constant 0 : i32
    return %c0_i32, %c0_i32_0 : i32, i32
  }
  func.func @transform_3(%arg0: i32) -> (i32, i32) {
    %c0_i32 = arith.constant 0 : i32
    %c0_i32_0 = arith.constant 0 : i32
    %c0_i32_1 = arith.constant 0 : i32
    return %c0_i32, %c0_i32_0 : i32, i32
  }
  func.func @transform_4(%arg0: i32) -> (i32, i32) {
    %c0_i32 = arith.constant 0 : i32
    %c0_i32_0 = arith.constant 0 : i32
    %c0_i32_1 = arith.constant 0 : i32
    return %c0_i32, %c0_i32_0 : i32, i32
  }
  func.func @transform_5(%arg0: i32) -> (i32, i32) {
    %c0_i32 = arith.constant 0 : i32
    %c0_i32_0 = arith.constant 0 : i32
    return %arg0, %c0_i32 : i32, i32
  }
}

</mosaic_0001>

<llo_original>
// kernel: tpu_custom_call.1
$region0: #{tpu_custom_call.1}
  #allocation0 [shape = 'u32[]', space=smem, size = 0x4, offset = 0x4, fixed_abs, tag = 'smem constant byte address 0x4 - core index']
  #allocation1 [shape = 'u32[144,128]{1,0:T(1,128)}', space=vmem, size = 0x12000, scoped, tag = 'internal scratch']
  %s0 = inlined_call_operand.vmem [shape: bf16[8,576], index: 0, kind: input, shape index: {}]
  %s1 = inlined_call_operand.vmem [shape: bf16[576,100], index: 1, kind: input, shape index: {}]
  %s2 = inlined_call_operand.vmem [shape: f32[1,100], index: 2, kind: input, shape index: {}]
  %s3 = inlined_call_operand.vmem [shape: bf16[100,22], index: 3, kind: input, shape index: {}]
  %s4 = inlined_call_operand.vmem [shape: f32[1,22], index: 4, kind: input, shape index: {}]
  %s5 = inlined_call_operand.hbm [shape: f32[8,22], index: 5, kind: output, shape index: {}]
  %s6 = sld [smem:[#allocation0]]
  $region30: #{tpu_custom_call.1} parent=0
    _
  %s8 = ssub.s32 1, %s6
  %s9 = scalar_select 0, %s8, %s6
  $region1: #{tpu_custom_call.1} parent=0
    #allocation2 [shape = 'u8[4096]{0}', space=vmem, size = 0x1000, scoped, tag = 'output window, operand 0, single buffered']
    #allocation3 [shape = 's32[1]{0}', space=sflag, size = 0x4, scoped, tag = 'scoped memory for tpu_custom_call.1']
    %10 = vsyncpa [#allocation3], 0
    // Predicated region
    $region2: #{tpu_custom_call.1} parent=1 // pred_check
      _
    $region3: #{tpu_custom_call.1} parent=1 // pred_check_branch
      %12 = sbr.rel (0) target = $region5
    $region4: #{tpu_custom_call.1} parent=1 // pred_region
      _
    $region5: #{tpu_custom_call.1} parent=1 // pred_fallthru
      _
    // Predicated region
    $region6: #{tpu_custom_call.1} parent=1 // pred_check
      _
    $region7: #{tpu_custom_call.1} parent=1 // pred_check_branch
      %14 = sbr.rel (0) target = $region9
    $region8: #{tpu_custom_call.1} parent=1 // pred_region
      _
    $region9: #{tpu_custom_call.1} parent=1 // pred_fallthru
      _
    // Predicated region
    $region10: #{tpu_custom_call.1} parent=1 // pred_check
      _
    $region11: #{tpu_custom_call.1} parent=1 // pred_check_branch
      %16 = sbr.rel (0) target = $region13
    $region12: #{tpu_custom_call.1} parent=1 // pred_region
      _
    $region13: #{tpu_custom_call.1} parent=1 // pred_fallthru
      _
    // Predicated region
    $region14: #{tpu_custom_call.1} parent=1 // pred_check
      _
    $region15: #{tpu_custom_call.1} parent=1 // pred_check_branch
      %18 = sbr.rel (0) target = $region17
    $region16: #{tpu_custom_call.1} parent=1 // pred_region
      _
    $region17: #{tpu_custom_call.1} parent=1 // pred_fallthru
      _
    // Predicated region
    $region18: #{tpu_custom_call.1} parent=1 // pred_check
      _
    $region19: #{tpu_custom_call.1} parent=1 // pred_check_branch
      %20 = sbr.rel (0) target = $region21
    $region20: #{tpu_custom_call.1} parent=1 // pred_region
      _
    $region21: #{tpu_custom_call.1} parent=1 // pred_fallthru
      _
    %v22 = vld [vmem:[%s0] sm:$0xff]
    %v23 = vld [vmem:[%s0 + $0x8] sm:$0xff]
    %v24 = vld [vmem:[%s0 + $0x10] sm:$0xf]
    %v25 = vld [vmem:[%s1] sm:$0xf]
    %v26 = vld [vmem:[%s1 + $0x4] sm:$0xf]
    %v27 = vld [vmem:[%s1 + $0x8] sm:$0xf]
    %v28 = vld [vmem:[%s1 + $0xc] sm:$0xf]
    %v29 = vld [vmem:[%s1 + $0x10] sm:$0xf]
    %v30 = vld [vmem:[%s1 + $0x14] sm:$0xf]
    %v31 = vld [vmem:[%s1 + $0x18] sm:$0xf]
    %v32 = vld [vmem:[%s1 + $0x1c] sm:$0xf]
    %v33 = vld [vmem:[%s1 + $0x20] sm:$0xf]
    %v34 = vld [vmem:[%s1 + $0x24] sm:$0xf]
    %v35 = vld [vmem:[%s1 + $0x28] sm:$0xf]
    %v36 = vld [vmem:[%s1 + $0x2c] sm:$0xf]
    %v37 = vld [vmem:[%s1 + $0x30] sm:$0xf]
    %v38 = vld [vmem:[%s1 + $0x34] sm:$0xf]
    %v39 = vld [vmem:[%s1 + $0x38] sm:$0xf]
    %v40 = vld [vmem:[%s1 + $0x3c] sm:$0xf]
    %v41 = vld [vmem:[%s1 + $0x40] sm:$0xf]
    %v42 = vld [vmem:[%s1 + $0x44] sm:$0xf]
    %v43 = vld [vmem:[%s1 + $0x48] sm:$0xf]
    %v44 = vld [vmem:[%s1 + $0x4c] sm:$0xf]
    %v45 = vld [vmem:[%s1 + $0x50] sm:$0xf]
    %v46 = vld [vmem:[%s1 + $0x54] sm:$0xf]
    %v47 = vld [vmem:[%s1 + $0x58] sm:$0xf]
    %v48 = vld [vmem:[%s1 + $0x5c] sm:$0xf]
    %v49 = vld [vmem:[%s1 + $0x60] sm:$0xf]
    %v50 = vld [vmem:[%s1 + $0x64] sm:$0xf]
    %v51 = vld [vmem:[%s1 + $0x68] sm:$0xf]
    %v52 = vld [vmem:[%s1 + $0x6c] sm:$0xf]
    %v53 = vld [vmem:[%s1 + $0x70] sm:$0xf]
    %v54 = vld [vmem:[%s1 + $0x74] sm:$0xf]
    %v55 = vld [vmem:[%s1 + $0x78] sm:$0xf]
    %v56 = vld [vmem:[%s1 + $0x7c] sm:$0xf]
    %v57 = vld [vmem:[%s1 + $0x80] sm:$0xf]
    %v58 = vld [vmem:[%s1 + $0x84] sm:$0xf]
    %v59 = vld [vmem:[%s1 + $0x88] sm:$0xf]
    %v60 = vld [vmem:[%s1 + $0x8c] sm:$0xf]
    %v61 = vld [vmem:[%s1 + $0x90] sm:$0xf]
    %v62 = vld [vmem:[%s1 + $0x94] sm:$0xf]
    %v63 = vld [vmem:[%s1 + $0x98] sm:$0xf]
    %v64 = vld [vmem:[%s1 + $0x9c] sm:$0xf]
    %v65 = vld [vmem:[%s1 + $0xa0] sm:$0xf]
    %v66 = vld [vmem:[%s1 + $0xa4] sm:$0xf]
    %v67 = vld [vmem:[%s1 + $0xa8] sm:$0xf]
    %v68 = vld [vmem:[%s1 + $0xac] sm:$0xf]
    %v69 = vld [vmem:[%s1 + $0xb0] sm:$0xf]
    %v70 = vld [vmem:[%s1 + $0xb4] sm:$0xf]
    %v71 = vld [vmem:[%s1 + $0xb8] sm:$0xf]
    %v72 = vld [vmem:[%s1 + $0xbc] sm:$0xf]
    %v73 = vld [vmem:[%s1 + $0xc0] sm:$0xf]
    %v74 = vld [vmem:[%s1 + $0xc4] sm:$0xf]
    %v75 = vld [vmem:[%s1 + $0xc8] sm:$0xf]
    %v76 = vld [vmem:[%s1 + $0xcc] sm:$0xf]
    %v77 = vld [vmem:[%s1 + $0xd0] sm:$0xf]
    %v78 = vld [vmem:[%s1 + $0xd4] sm:$0xf]
    %v79 = vld [vmem:[%s1 + $0xd8] sm:$0xf]
    %v80 = vld [vmem:[%s1 + $0xdc] sm:$0xf]
    %v81 = vld [vmem:[%s1 + $0xe0] sm:$0xf]
    %v82 = vld [vmem:[%s1 + $0xe4] sm:$0xf]
    %v83 = vld [vmem:[%s1 + $0xe8] sm:$0xf]
    %v84 = vld [vmem:[%s1 + $0xec] sm:$0xf]
    %v85 = vld [vmem:[%s1 + $0xf0] sm:$0xf]
    %v86 = vld [vmem:[%s1 + $0xf4] sm:$0xf]
    %v87 = vld [vmem:[%s1 + $0xf8] sm:$0xf]
    %v88 = vld [vmem:[%s1 + $0xfc] sm:$0xf]
    %v89 = vld [vmem:[%s1 + $0x100] sm:$0xf]
    %v90 = vld [vmem:[%s1 + $0x104] sm:$0xf]
    %v91 = vld [vmem:[%s1 + $0x108] sm:$0xf]
    %v92 = vld [vmem:[%s1 + $0x10c] sm:$0xf]
    %v93 = vld [vmem:[%s1 + $0x110] sm:$0xf]
    %v94 = vld [vmem:[%s1 + $0x114] sm:$0xf]
    %v95 = vld [vmem:[%s1 + $0x118] sm:$0xf]
    %v96 = vld [vmem:[%s1 + $0x11c] sm:$0xf]
    %v97 = vld [vmem:[%s2] sm:$0x1]
    %v99 = vlaneseq
    %v100 = vshrl.u32 %v99, 7
    %v101 = vsub.s32 0, %v100
    %v102 = vrot.slane %v97, %v101
    %v107 = vunpack.c.l.b16 %v22
    %v108 = vunpack.c.h.b16 %v22
    %v109 = vunpack.c.l.b16 %v23
    %v110 = vunpack.c.h.b16 %v23
    %v111 = vunpack.c.l.b16 %v24
    %v112 = vpack.c.b16 %v107, %v107
    %v113 = vpack.c.b16 %v108, %v108
    %v114 = vpack.c.b16 %v109, %v109
    %v115 = vpack.c.b16 %v110, %v110
    %v116 = vpack.c.b16 %v111, %v111
    %v193 = vunpack.c.l.b16 %v25
    %v194 = vunpack.c.l.b16 %v26
    %v195 = vunpack.c.l.b16 %v27
    %v196 = vunpack.c.l.b16 %v28
    %v197 = vunpack.c.l.b16 %v29
    %v198 = vunpack.c.l.b16 %v30
    %v199 = vunpack.c.l.b16 %v31
    %v200 = vunpack.c.l.b16 %v32
    %v201 = vunpack.c.l.b16 %v33
    %v202 = vunpack.c.l.b16 %v34
    %v203 = vunpack.c.l.b16 %v35
    %v204 = vunpack.c.l.b16 %v36
    %v205 = vunpack.c.l.b16 %v37
    %v206 = vunpack.c.l.b16 %v38
    %v207 = vunpack.c.l.b16 %v39
    %v208 = vunpack.c.l.b16 %v40
    %v209 = vunpack.c.l.b16 %v41
    %v210 = vunpack.c.l.b16 %v42
    %v211 = vunpack.c.l.b16 %v43
    %v212 = vunpack.c.l.b16 %v44
    %v213 = vunpack.c.l.b16 %v45
    %v214 = vunpack.c.l.b16 %v46
    %v215 = vunpack.c.l.b16 %v47
    %v216 = vunpack.c.l.b16 %v48
    %v217 = vunpack.c.l.b16 %v49
    %v218 = vunpack.c.l.b16 %v50
    %v219 = vunpack.c.l.b16 %v51
    %v220 = vunpack.c.l.b16 %v52
    %v221 = vunpack.c.l.b16 %v53
    %v222 = vunpack.c.l.b16 %v54
    %v223 = vunpack.c.l.b16 %v55
    %v224 = vunpack.c.l.b16 %v56
    %v225 = vunpack.c.l.b16 %v57
    %v226 = vunpack.c.l.b16 %v58
    %v227 = vunpack.c.l.b16 %v59
    %v228 = vunpack.c.l.b16 %v60
    %v229 = vunpack.c.l.b16 %v61
    %v230 = vunpack.c.l.b16 %v62
    %v231 = vunpack.c.l.b16 %v63
    %v232 = vunpack.c.l.b16 %v64
    %v233 = vunpack.c.l.b16 %v65
    %v234 = vunpack.c.l.b16 %v66
    %v235 = vunpack.c.l.b16 %v67
    %v236 = vunpack.c.l.b16 %v68
    %v237 = vunpack.c.l.b16 %v69
    %v238 = vunpack.c.l.b16 %v70
    %v239 = vunpack.c.l.b16 %v71
    %v240 = vunpack.c.l.b16 %v72
    %v241 = vunpack.c.l.b16 %v73
    %v242 = vunpack.c.l.b16 %v74
    %v243 = vunpack.c.l.b16 %v75
    %v244 = vunpack.c.l.b16 %v76
    %v245 = vunpack.c.l.b16 %v77
    %v246 = vunpack.c.l.b16 %v78
    %v247 = vunpack.c.l.b16 %v79
    %v248 = vunpack.c.l.b16 %v80
    %v249 = vunpack.c.l.b16 %v81
    %v250 = vunpack.c.l.b16 %v82
    %v251 = vunpack.c.l.b16 %v83
    %v252 = vunpack.c.l.b16 %v84
    %v253 = vunpack.c.l.b16 %v85
    %v254 = vunpack.c.l.b16 %v86
    %v255 = vunpack.c.l.b16 %v87
    %v256 = vunpack.c.l.b16 %v88
    %v257 = vunpack.c.l.b16 %v89
    %v258 = vunpack.c.l.b16 %v90
    %v259 = vunpack.c.l.b16 %v91
    %v260 = vunpack.c.l.b16 %v92
    %v261 = vunpack.c.l.b16 %v93
    %v262 = vunpack.c.l.b16 %v94
    %v263 = vunpack.c.l.b16 %v95
    %v264 = vunpack.c.l.b16 %v96
    %v265 = vpack.c.b16 %v194, %v193
    %v266 = vpack.c.b16 %v196, %v195
    %v267 = vpack.c.b16 %v198, %v197
    %v268 = vpack.c.b16 %v200, %v199
    %v269 = vpack.c.b16 %v202, %v201
    %v270 = vpack.c.b16 %v204, %v203
    %v271 = vpack.c.b16 %v206, %v205
    %v272 = vpack.c.b16 %v208, %v207
    %v273 = vpack.c.b16 %v210, %v209
    %v274 = vpack.c.b16 %v212, %v211
    %v275 = vpack.c.b16 %v214, %v213
    %v276 = vpack.c.b16 %v216, %v215
    %v277 = vpack.c.b16 %v218, %v217
    %v278 = vpack.c.b16 %v220, %v219
    %v279 = vpack.c.b16 %v222, %v221
    %v280 = vpack.c.b16 %v224, %v223
    %v281 = vpack.c.b16 %v226, %v225
    %v282 = vpack.c.b16 %v228, %v227
    %v283 = vpack.c.b16 %v230, %v229
    %v284 = vpack.c.b16 %v232, %v231
    %v285 = vpack.c.b16 %v234, %v233
    %v286 = vpack.c.b16 %v236, %v235
    %v287 = vpack.c.b16 %v238, %v237
    %v288 = vpack.c.b16 %v240, %v239
    %v289 = vpack.c.b16 %v242, %v241
    %v290 = vpack.c.b16 %v244, %v243
    %v291 = vpack.c.b16 %v246, %v245
    %v292 = vpack.c.b16 %v248, %v247
    %v293 = vpack.c.b16 %v250, %v249
    %v294 = vpack.c.b16 %v252, %v251
    %v295 = vpack.c.b16 %v254, %v253
    %v296 = vpack.c.b16 %v256, %v255
    %v297 = vpack.c.b16 %v258, %v257
    %v298 = vpack.c.b16 %v260, %v259
    %v299 = vpack.c.b16 %v262, %v261
    %v300 = vpack.c.b16 %v264, %v263
    %vm337 = vcmask 523264
    %v339 = vsel %vm337, %v116, 0
    %341 = vmatprep.subr.bf16.mxu0 0
    %342 = vmatpush1.bf16.msra.mxu0 %v272
    %343 = vmatprep.subr.bf16.mxu0 0
    %344 = vmatpush1.bf16.msra.mxu0 %v271
    %345 = vmatprep.subr.bf16.mxu0 0
    %346 = vmatpush1.bf16.msra.mxu0 %v270
    %347 = vmatprep.subr.bf16.mxu0 0
    %348 = vmatpush1.bf16.msra.mxu0 %v269
    %349 = vmatprep.subr.bf16.mxu0 0
    %350 = vmatpush1.bf16.msra.mxu0 %v268
    %351 = vmatprep.subr.bf16.mxu0 0
    %352 = vmatpush1.bf16.msra.mxu0 %v267
    %353 = vmatprep.subr.bf16.mxu0 0
    %354 = vmatpush1.bf16.msra.mxu0 %v266
    %355 = vmatprep.subr.bf16.mxu0 0
    %356 = vmatpush1.bf16.msra.mxu0 %v265
    %357 = vmatprep.subr.bf16.mxu0 0
    %358 = vmatpush2.bf16.msra.mxu0 %v280
    %359 = vmatprep.subr.bf16.mxu0 0
    %360 = vmatpush2.bf16.msra.mxu0 %v279
    %361 = vmatprep.subr.bf16.mxu0 0
    %362 = vmatpush2.bf16.msra.mxu0 %v278
    %363 = vmatprep.subr.bf16.mxu0 0
    %364 = vmatpush2.bf16.msra.mxu0 %v277
    %365 = vmatprep.subr.bf16.mxu0 0
    %366 = vmatpush2.bf16.msra.mxu0 %v276
    %367 = vmatprep.subr.bf16.mxu0 0
    %368 = vmatpush2.bf16.msra.mxu0 %v275
    %369 = vmatprep.subr.bf16.mxu0 0
    %370 = vmatpush2.bf16.msra.mxu0 %v274
    %371 = vmatprep.subr.bf16.mxu0 0
    %372 = vmatpush2.bf16.msra.mxu0 %v273
    %373 = vmatprep.mubr.bf16.mxu0 %v113
    %374 = vmatmul.mubr.bf16.gmra.mxu0 %v112
    %v375 = vpop.f32.mrf.mxu0
    %v376 = vadd.f32 %v102, %v375
    %v377 = vpop.f32.mrf.mxu0
    %v378 = vpop.f32.mrf.mxu0
    %v379 = vpop.f32.mrf.mxu0
    %380 = vdwg.mxu0
    %381 = vmatprep.subr.bf16.mxu0 0
    %382 = vmatpush1.bf16.msra.mxu0 %v288
    %383 = vmatprep.subr.bf16.mxu0 0
    %384 = vmatpush1.bf16.msra.mxu0 %v287
    %385 = vmatprep.subr.bf16.mxu0 0
    %386 = vmatpush1.bf16.msra.mxu0 %v286
    %387 = vmatprep.subr.bf16.mxu0 0
    %388 = vmatpush1.bf16.msra.mxu0 %v285
    %389 = vmatprep.subr.bf16.mxu0 0
    %390 = vmatpush1.bf16.msra.mxu0 %v284
    %391 = vmatprep.subr.bf16.mxu0 0
    %392 = vmatpush1.bf16.msra.mxu0 %v283
    %393 = vmatprep.subr.bf16.mxu0 0
    %394 = vmatpush1.bf16.msra.mxu0 %v282
    %395 = vmatprep.subr.bf16.mxu0 0
    %396 = vmatpush1.bf16.msra.mxu0 %v281
    %397 = vmatprep.subr.bf16.mxu0 0
    %398 = vmatpush2.bf16.msra.mxu0 %v296
    %399 = vmatprep.subr.bf16.mxu0 0
    %400 = vmatpush2.bf16.msra.mxu0 %v295
    %401 = vmatprep.subr.bf16.mxu0 0
    %402 = vmatpush2.bf16.msra.mxu0 %v294
    %403 = vmatprep.subr.bf16.mxu0 0
    %404 = vmatpush2.bf16.msra.mxu0 %v293
    %405 = vmatprep.subr.bf16.mxu0 0
    %406 = vmatpush2.bf16.msra.mxu0 %v292
    %407 = vmatprep.subr.bf16.mxu0 0
    %408 = vmatpush2.bf16.msra.mxu0 %v291
    %409 = vmatprep.subr.bf16.mxu0 0
    %410 = vmatpush2.bf16.msra.mxu0 %v290
    %411 = vmatprep.subr.bf16.mxu0 0
    %412 = vmatpush2.bf16.msra.mxu0 %v289
    %413 = vmatprep.mubr.bf16.mxu0 %v115
    %414 = vmatmul.mubr.bf16.gmra.mxu0 %v114
    %v415 = vpop.f32.mrf.mxu0
    %v416 = vadd.f32 %v376, %v415
    %v417 = vpop.f32.mrf.mxu0
    %v418 = vpop.f32.mrf.mxu0
    %v419 = vpop.f32.mrf.mxu0
    %420 = vdwg.mxu0
    %421 = vmatprep.subr.bf16.mxu0 0
    %422 = vmatpush1.bf16.msra.mxu0 0
    %423 = vmatprep.subr.bf16.mxu0 0
    %424 = vmatpush1.bf16.msra.mxu0 0
    %425 = vmatprep.subr.bf16.mxu0 0
    %426 = vmatpush1.bf16.msra.mxu0 0
    %427 = vmatprep.subr.bf16.mxu0 0
    %428 = vmatpush1.bf16.msra.mxu0 0
    %429 = vmatprep.subr.bf16.mxu0 0
    %430 = vmatpush1.bf16.msra.mxu0 %v300
    %431 = vmatprep.subr.bf16.mxu0 0
    %432 = vmatpush1.bf16.msra.mxu0 %v299
    %433 = vmatprep.subr.bf16.mxu0 0
    %434 = vmatpush1.bf16.msra.mxu0 %v298
    %435 = vmatprep.subr.bf16.mxu0 0
    %436 = vmatpush1.bf16.msra.mxu0 %v297
    %437 = vmatprep.subr.bf16.mxu0 0
    %438 = vmatpush2.bf16.msra.mxu0 0
    %439 = vmatprep.subr.bf16.mxu0 0
    %440 = vmatpush2.bf16.msra.mxu0 0
    %441 = vmatprep.subr.bf16.mxu0 0
    %442 = vmatpush2.bf16.msra.mxu0 0
    %443 = vmatprep.subr.bf16.mxu0 0
    %444 = vmatpush2.bf16.msra.mxu0 0
    %445 = vmatprep.subr.bf16.mxu0 0
    %446 = vmatpush2.bf16.msra.mxu0 0
    %447 = vmatprep.subr.bf16.mxu0 0
    %448 = vmatpush2.bf16.msra.mxu0 0
    %449 = vmatprep.subr.bf16.mxu0 0
    %450 = vmatpush2.bf16.msra.mxu0 0
    %451 = vmatprep.subr.bf16.mxu0 0
    %452 = vmatpush2.bf16.msra.mxu0 0
    %453 = vmatprep.mubr.bf16.mxu0 0
    %454 = vmatmul.mubr.bf16.gmra.mxu0 %v339
    %v455 = vpop.f32.mrf.mxu0
    %v456 = vadd.f32 %v416, %v455
    %v457 = vpop.f32.mrf.mxu0
    %v458 = vpop.f32.mrf.mxu0
    %v459 = vpop.f32.mrf.mxu0
    %460 = vdwg.mxu0
    %v461 = vmax.f32 %v456, 0.0
    %v462 = vpack.c.bf16 %v461, %v461
    %v463 = vld [vmem:[%s3] sm:$0xf]
    %v464 = vld [vmem:[%s3 + $0x4] sm:$0xf]
    %v465 = vld [vmem:[%s3 + $0x8] sm:$0xf]
    %v466 = vld [vmem:[%s3 + $0xc] sm:$0xf]
    %v467 = vld [vmem:[%s3 + $0x10] sm:$0xf]
    %v468 = vld [vmem:[%s3 + $0x14] sm:$0xf]
    %v469 = vld [vmem:[%s3 + $0x18] sm:$0xf]
    %v470 = vld [vmem:[%s3 + $0x1c] sm:$0xf]
    %v471 = vld [vmem:[%s3 + $0x20] sm:$0xf]
    %v472 = vld [vmem:[%s3 + $0x24] sm:$0xf]
    %v473 = vld [vmem:[%s3 + $0x28] sm:$0xf]
    %v474 = vld [vmem:[%s3 + $0x2c] sm:$0xf]
    %v475 = vld [vmem:[%s3 + $0x30] sm:$0x3]
    %v476 = vld [vmem:[%s4] sm:$0x1]
    %v478 = vlaneseq
    %v479 = vshrl.u32 %v478, 7
    %v480 = vsub.s32 0, %v479
    %v481 = vrot.slane %v476, %v480
    %v496 = vunpack.c.l.b16 %v463
    %v497 = vunpack.c.l.b16 %v464
    %v498 = vunpack.c.l.b16 %v465
    %v499 = vunpack.c.l.b16 %v466
    %v500 = vunpack.c.l.b16 %v467
    %v501 = vunpack.c.l.b16 %v468
    %v502 = vunpack.c.l.b16 %v469
    %v503 = vunpack.c.l.b16 %v470
    %v504 = vunpack.c.l.b16 %v471
    %v505 = vunpack.c.l.b16 %v472
    %v506 = vunpack.c.l.b16 %v473
    %v507 = vunpack.c.l.b16 %v474
    %v508 = vunpack.c.l.b16 %v475
    %v509 = vpack.c.b16 %v497, %v496
    %v510 = vpack.c.b16 %v499, %v498
    %v511 = vpack.c.b16 %v501, %v500
    %v512 = vpack.c.b16 %v503, %v502
    %v513 = vpack.c.b16 %v505, %v504
    %v514 = vpack.c.b16 %v507, %v506
    %v515 = vpack.c.b16 %v508, %v508
    %vm522 = vcmask 818176
    %v524 = vsel %vm522, %v462, 0
    %vm526 = vcmask 1041408
    %v528 = vsel %vm526, %v515, 0
    %530 = vmatprep.subr.bf16.mxu0 0
    %531 = vmatpush1.bf16.msra.mxu0 0
    %532 = vmatprep.subr.bf16.mxu0 0
    %533 = vmatpush1.bf16.msra.mxu0 %v528
    %534 = vmatprep.subr.bf16.mxu0 0
    %535 = vmatpush1.bf16.msra.mxu0 %v514
    %536 = vmatprep.subr.bf16.mxu0 0
    %537 = vmatpush1.bf16.msra.mxu0 %v513
    %538 = vmatprep.subr.bf16.mxu0 0
    %539 = vmatpush1.bf16.msra.mxu0 %v512
    %540 = vmatprep.subr.bf16.mxu0 0
    %541 = vmatpush1.bf16.msra.mxu0 %v511
    %542 = vmatprep.subr.bf16.mxu0 0
    %543 = vmatpush1.bf16.msra.mxu0 %v510
    %544 = vmatprep.subr.bf16.mxu0 0
    %545 = vmatpush1.bf16.msra.mxu0 %v509
    %546 = vmatprep.subr.bf16.mxu0 0
    %547 = vmatpush2.bf16.msra.mxu0 0
    %548 = vmatprep.subr.bf16.mxu0 0
    %549 = vmatpush2.bf16.msra.mxu0 0
    %550 = vmatprep.subr.bf16.mxu0 0
    %551 = vmatpush2.bf16.msra.mxu0 0
    %552 = vmatprep.subr.bf16.mxu0 0
    %553 = vmatpush2.bf16.msra.mxu0 0
    %554 = vmatprep.subr.bf16.mxu0 0
    %555 = vmatpush2.bf16.msra.mxu0 0
    %556 = vmatprep.subr.bf16.mxu0 0
    %557 = vmatpush2.bf16.msra.mxu0 0
    %558 = vmatprep.subr.bf16.mxu0 0
    %559 = vmatpush2.bf16.msra.mxu0 0
    %560 = vmatprep.subr.bf16.mxu0 0
    %561 = vmatpush2.bf16.msra.mxu0 0
    %562 = vmatprep.mubr.bf16.mxu0 0
    %563 = vmatmul.mubr.bf16.gmra.mxu0 %v524
    %v564 = vpop.f32.mrf.mxu0
    %v565 = vadd.f32 %v481, %v564
    %v566 = vpop.f32.mrf.mxu0
    %v567 = vpop.f32.mrf.mxu0
    %v568 = vpop.f32.mrf.mxu0
    %569 = vdwg.mxu0
    %vm570 = vcmask 179200
    %v571 = vsel %vm570, %v565, -inf
    %572 = vmax.xlane.f32.xlu0 %v571
    %v573 = vpop.xlane.xlu0 %572
    %v574 = vsub.f32 %v565, %v573
    %v575 = vmul.f32 %v574, 1.442695
    %v576 = vpow.pop %v575
    %v577 = vsel %vm570, %v576, 0.0
    %578 = vadd.xlane.f32.xlu0 %v577
    %v579 = vpop.xlane.xlu0 %578
    %v580 = vrcp.pop %v579
    %v581 = vmul.f32 %v576, %v580
    %582 = vst.msk [vmem:[#allocation2] sm:$0xff] %vm570, %v581
    // Predicated region
    $region22: #{tpu_custom_call.1} parent=1 // pred_check
      _
    $region23: #{tpu_custom_call.1} parent=1 // pred_check_branch
      %584 = sbr.rel (0) target = $region25
    $region24: #{tpu_custom_call.1} parent=1 // pred_region
      %s586 = ssub.s32 128, 128
      %587 = vsyncadd [#allocation3], %s586
      %s589 = sshll.u32 [#allocation2], 4
      %s590 = int_to_ptr.vmem [resolvable:$true] %s589
      %592 = dma.vmem_to_hbm [thread:$0]  %s590, 128, %s5, [#allocation3]
    $region25: #{tpu_custom_call.1} parent=1 // pred_fallthru
      _
    // Predicated region
    $region26: #{tpu_custom_call.1} parent=1 // pred_check
      _
    $region27: #{tpu_custom_call.1} parent=1 // pred_check_branch
      %594 = sbr.rel (0) target = $region29
    $region28: #{tpu_custom_call.1} parent=1 // pred_region
      %595 = dma.done [#allocation3], 128
    $region29: #{tpu_custom_call.1} parent=1 // pred_fallthru
      _
    %596 = vsyncpa [#allocation3], 1

</llo_original>
